<compile_context>
chip_gen: v5e
topology: v5e:2x2
jax: 0.10.0
libtpu: 0.0.40
codegen_flags: <defaults>
</compile_context>

<pallas_src>
import jax
import jax.numpy as jnp
from jax.experimental import pallas as pl
from jax.experimental.pallas import tpu as pltpu

IN_FEATURES = 5
OUT_FEATURES = 5

_DEFAULT_BLOCK_B = 16384   # batch-rows per tile (sublane axis); multiple of 8
_MIN_BLOCK_B = 1024        # floor so the per-grid-step overhead stays amortized
_TARGET_STEPS = 8          # keep >= 8 grid steps for large B (v7x megacore)


def _round_up(n, m):
    return ((n + m - 1) // m) * m


def _cdiv(a, b):
    return (a + b - 1) // b


def _linear_rows_kernel(x_ref, wt_ref, b_ref, o_ref):
    # Native layout: batch rows on the sublane axis, the 5 features on lanes.
    #   x_ref : (TB, IN)   -- X tile, source dtype (cast to f32 in-kernel)
    #   wt_ref: (IN, OUT)  -- W^T (pre-transposed 5x5, negligible wrapper cost)
    #   b_ref : (1, OUT)   -- broadcasts over the batch rows
    #   o_ref : (TB, OUT)  -- O tile;  O = X @ W^T + b
    x = x_ref[...].astype(jnp.float32)              # X.float()
    wt = wt_ref[...].astype(jnp.float32)
    b = b_ref[...].astype(jnp.float32)
    o = jnp.dot(x, wt, preferred_element_type=jnp.float32) + b
    o_ref[...] = o.astype(o_ref.dtype)


def inner_model_forward(x, weight, bias, *, block_b=_DEFAULT_BLOCK_B,
                        out_dtype=jnp.float32):
    """InnerModel forward: X.float() -> X @ W^T + b.

    x: (B, 5) any float dtype; weight: (5, 5) PyTorch (out, in); bias: (5,).
    Returns (B, 5) in `out_dtype` (float32 by default, matching the module).
    """
    assert x.ndim == 2 and x.shape[1] == IN_FEATURES
    B = x.shape[0]

    # --- tile selection -----------------------------------------------------
    # Batch-row tile: multiple of 8 (sublane), capped by block_b and by the
    # (8-aligned) batch itself; for large B keep >= _TARGET_STEPS grid steps so
    # v7x's second TensorCore gets work.
    block_b = _round_up(max(block_b, 8), 8)
    tb = min(block_b, max(_MIN_BLOCK_B, _round_up(_cdiv(B, _TARGET_STEPS), 8)))
    tb = min(tb, _round_up(B, 8))
    n_steps = _cdiv(B, tb)           # last tile may be partial; Pallas masks it

    # --- VMEM budget --------------------------------------------------------
    # (TB, 5) f32 blocks occupy 512 B/row in VMEM (lane padding to 128);
    # double-buffered input + output => ~2 KiB/row, plus tiny weight/bias.
    vmem_needed = 2 * tb * 512 + 2 * tb * 512 + (64 << 10)
    vmem_limit = max(16 << 20, int(vmem_needed * 1.25) + (4 << 20))

    # --- tiny parameter glue (100 B / 20 B; not an HBM "pass") ---------------
    w_t = jnp.transpose(weight)                      # (IN, OUT)
    b2d = bias.reshape(1, OUT_FEATURES)

    cost = pl.CostEstimate(
        flops=2 * IN_FEATURES * OUT_FEATURES * B,
        transcendentals=0,
        bytes_accessed=(B * IN_FEATURES * x.dtype.itemsize
                        + B * OUT_FEATURES * jnp.dtype(out_dtype).itemsize
                        + (IN_FEATURES * OUT_FEATURES + OUT_FEATURES) * 4),
    )

    out = pl.pallas_call(
        _linear_rows_kernel,
        out_shape=jax.ShapeDtypeStruct((B, OUT_FEATURES), out_dtype),
        grid=(n_steps,),
        in_specs=[
            pl.BlockSpec((tb, IN_FEATURES), lambda i: (i, 0)),
            pl.BlockSpec((IN_FEATURES, OUT_FEATURES), lambda i: (0, 0)),
            pl.BlockSpec((1, OUT_FEATURES), lambda i: (0, 0)),
        ],
        out_specs=pl.BlockSpec((tb, OUT_FEATURES), lambda i: (i, 0)),
        compiler_params=pltpu.CompilerParams(
            dimension_semantics=("parallel",),
            vmem_limit_bytes=vmem_limit,
        ),
        cost_estimate=cost,
    )(x, w_t, b2d)

    return out


if __name__ == "__main__":
    key = jax.random.PRNGKey(0)
    kx, kw, kb, kx2 = jax.random.split(key, 4)

    # Deterministic parameter init (synthetic; shapes from nn.Linear(5, 5)).
    bound = 1.0 / (IN_FEATURES ** 0.5)
    weight = jax.random.uniform(
        kw, (OUT_FEATURES, IN_FEATURES), jnp.float32, -bound, bound)
    bias = jax.random.uniform(kb, (OUT_FEATURES,), jnp.float32, -bound, bound)

    # Test 1: small batch (single partial tile, 8 rows), f32 input.
    x1 = jax.random.normal(kx, (8, IN_FEATURES), jnp.float32)
    out1 = jax.block_until_ready(inner_model_forward(x1, weight, bias))
    ref1 = x1.astype(jnp.float32) @ weight.T + bias
    assert out1.shape == (8, OUT_FEATURES)
    assert out1.dtype == jnp.float32
    assert jnp.allclose(out1, ref1, atol=2e-4, rtol=2e-4)

    # Test 2: multi-step grid with a ragged tail (2000 rows -> 2 tiles of 1024,
    # last tile partial) and a bf16 input exercising the in-kernel X.float().
    x2 = jax.random.normal(kx2, (2000, IN_FEATURES), jnp.bfloat16)
    out2 = jax.block_until_ready(inner_model_forward(x2, weight, bias))
    ref2 = x2.astype(jnp.float32) @ weight.T + bias
    assert out2.shape == (2000, OUT_FEATURES)
    assert jnp.allclose(out2, ref2, atol=1e-3, rtol=1e-3)

    print("KERNEL_OK")
</pallas_src>

<mosaic_0001>
module attributes {stable_mosaic.version = 11 : i64} {
  func.func @_linear_rows_kernel(%arg0: i32, %arg1: memref<8x5xf32, #tpu.memory_space<vmem>>, %arg2: memref<5x5xf32, #tpu.memory_space<vmem>>, %arg3: memref<1x5xf32, #tpu.memory_space<vmem>>, %arg4: memref<8x5xf32, #tpu.memory_space<vmem>>) attributes {dimension_semantics = [#tpu.dimension_semantics<parallel>], iteration_bounds = array<i64: 1>, scalar_prefetch = 0 : i64, scratch_operands = 0 : i64, tpu.core_type = #tpu.core_type<tc>, window_params = [{transform_indices = @transform_0, window_bounds = array<i64: 8, 5>}, {pipeline_mode = #tpu.pipeline_mode<synchronous>, transform_indices = @transform_1, window_bounds = array<i64: 5, 5>}, {pipeline_mode = #tpu.pipeline_mode<synchronous>, transform_indices = @transform_2, window_bounds = array<i64: 1, 5>}, {transform_indices = @transform_3, window_bounds = array<i64: 8, 5>}]} {
    %c0 = arith.constant 0 : index
    %c0_0 = arith.constant 0 : index
    %0 = vector.load %arg1[%c0, %c0_0] : memref<8x5xf32, #tpu.memory_space<vmem>>, vector<8x5xf32>
    %c0_1 = arith.constant 0 : index
    %c0_2 = arith.constant 0 : index
    %1 = vector.load %arg2[%c0_1, %c0_2] : memref<5x5xf32, #tpu.memory_space<vmem>>, vector<5x5xf32>
    %c0_3 = arith.constant 0 : index
    %c0_4 = arith.constant 0 : index
    %2 = vector.load %arg3[%c0_3, %c0_4] : memref<1x5xf32, #tpu.memory_space<vmem>>, vector<1x5xf32>
    %cst = arith.constant dense<0.000000e+00> : vector<8x5xf32>
    %3 = tpu.matmul %0, %1, %cst {dimension_numbers = #tpu.dot_dimension_numbers<[1], [0], [0], [1], [0, 0, 1, 1], [], []>} : vector<8x5xf32>, vector<5x5xf32>, vector<8x5xf32> -> vector<8x5xf32>
    %4 = vector.broadcast %2 : vector<1x5xf32> to vector<8x5xf32>
    %5 = arith.addf %3, %4 : vector<8x5xf32>
    %c0_5 = arith.constant 0 : index
    %c0_6 = arith.constant 0 : index
    %6 = vector.load %arg4[%c0_5, %c0_6] : memref<8x5xf32, #tpu.memory_space<vmem>>, vector<8x5xf32>
    tpu.vector_store %arg4[%c0_5, %c0_6], %5 {strides = array<i32>} : memref<8x5xf32, #tpu.memory_space<vmem>>, vector<8x5xf32>,
    return
  }
  func.func @transform_0(%arg0: i32) -> (i32, i32) {
    %c0_i32 = arith.constant 0 : i32
    %c0_i32_0 = arith.constant 0 : i32
    return %arg0, %c0_i32 : i32, i32
  }
  func.func @transform_1(%arg0: i32) -> (i32, i32) {
    %c0_i32 = arith.constant 0 : i32
    %c0_i32_0 = arith.constant 0 : i32
    %c0_i32_1 = arith.constant 0 : i32
    return %c0_i32, %c0_i32_0 : i32, i32
  }
  func.func @transform_2(%arg0: i32) -> (i32, i32) {
    %c0_i32 = arith.constant 0 : i32
    %c0_i32_0 = arith.constant 0 : i32
    %c0_i32_1 = arith.constant 0 : i32
    return %c0_i32, %c0_i32_0 : i32, i32
  }
  func.func @transform_3(%arg0: i32) -> (i32, i32) {
    %c0_i32 = arith.constant 0 : i32
    %c0_i32_0 = arith.constant 0 : i32
    return %arg0, %c0_i32 : i32, i32
  }
}

</mosaic_0001>

<llo_original>
// kernel: tpu_custom_call.1
$region0: #{tpu_custom_call.1}
  #allocation0 [shape = 'u32[]', space=smem, size = 0x4, offset = 0x4, fixed_abs, tag = 'smem constant byte address 0x4 - core index']
  #allocation1 [shape = 'u32[72,128]{1,0:T(1,128)}', space=vmem, size = 0x9000, scoped, tag = 'internal scratch']
  %s0 = inlined_call_operand.hbm [shape: f32[8,5], index: 0, kind: input, shape index: {}]
  %s1 = inlined_call_operand.hbm [shape: f32[5,5], index: 1, kind: input, shape index: {}]
  %s2 = inlined_call_operand.vmem [shape: f32[1,5], index: 2, kind: input, shape index: {}]
  %s3 = inlined_call_operand.hbm [shape: f32[8,5], index: 3, kind: output, shape index: {}]
  %s4 = sld [smem:[#allocation0]]
  $region30: #{tpu_custom_call.1} parent=0
    _
  %s6 = ssub.s32 1, %s4
  %s7 = scalar_select 0, %s6, %s4
  $region1: #{tpu_custom_call.1} parent=0
    #allocation2 [shape = 'u8[4096]{0}', space=vmem, size = 0x1000, scoped, tag = 'input window, operand 0, single buffered']
    #allocation3 [shape = 's32[1]{0}', space=sflag, size = 0x4, scoped, tag = 'scoped memory for tpu_custom_call.1']
    #allocation4 [shape = 's32[1]{0}', space=sflag, size = 0x4, scoped, tag = 'scoped memory for tpu_custom_call.1']
    #allocation5 [shape = 'u8[4096]{0}', space=vmem, size = 0x1000, scoped, tag = 'input window, operand 1, single buffered']
    #allocation6 [shape = 's32[1]{0}', space=sflag, size = 0x4, scoped, tag = 'scoped memory for tpu_custom_call.1']
    #allocation7 [shape = 'u8[4096]{0}', space=vmem, size = 0x1000, scoped, tag = 'output window, operand 0, single buffered']
    %8 = vsyncpa [#allocation3], 0
    %9 = vsyncpa [#allocation6], 0
    %10 = vsyncpa [#allocation4], 0
    // Predicated region
    $region2: #{tpu_custom_call.1} parent=1 // pred_check
      _
    $region3: #{tpu_custom_call.1} parent=1 // pred_check_branch
      %12 = sbr.rel (0) target = $region5
    $region4: #{tpu_custom_call.1} parent=1 // pred_region
      %14 = vsyncadd [#allocation3], 0
      %s16 = sshll.u32 %s0, 4
      %s17 = int_to_ptr.hbm [resolvable:$true] %s16
      %s18 = sshll.u32 [#allocation2], 4
      %s19 = int_to_ptr.vmem [resolvable:$true] %s18
      %21 = dma.hbm_to_vmem [thread:$0]  %s17, 128, %s19, [#allocation3]
    $region5: #{tpu_custom_call.1} parent=1 // pred_fallthru
      _
    // Predicated region
    $region6: #{tpu_custom_call.1} parent=1 // pred_check
      _
    $region7: #{tpu_custom_call.1} parent=1 // pred_check_branch
      %23 = sbr.rel (0) target = $region9
    $region8: #{tpu_custom_call.1} parent=1 // pred_region
      %25 = vsyncadd [#allocation6], 0
      %s27 = sshll.u32 %s1, 4
      %s28 = int_to_ptr.hbm [resolvable:$true] %s27
      %s29 = sshll.u32 [#allocation5], 4
      %s30 = int_to_ptr.vmem [resolvable:$true] %s29
      %32 = dma.hbm_to_vmem [thread:$0]  %s28, 128, %s30, [#allocation6]
    $region9: #{tpu_custom_call.1} parent=1 // pred_fallthru
      _
    // Predicated region
    $region10: #{tpu_custom_call.1} parent=1 // pred_check
      _
    $region11: #{tpu_custom_call.1} parent=1 // pred_check_branch
      %34 = sbr.rel (0) target = $region13
    $region12: #{tpu_custom_call.1} parent=1 // pred_region
      _
    $region13: #{tpu_custom_call.1} parent=1 // pred_fallthru
      _
    // Predicated region
    $region14: #{tpu_custom_call.1} parent=1 // pred_check
      _
    $region15: #{tpu_custom_call.1} parent=1 // pred_check_branch
      %36 = sbr.rel (0) target = $region17
    $region16: #{tpu_custom_call.1} parent=1 // pred_region
      %38 = dma.done [#allocation3], 128
    $region17: #{tpu_custom_call.1} parent=1 // pred_fallthru
      _
    // Predicated region
    $region18: #{tpu_custom_call.1} parent=1 // pred_check
      _
    $region19: #{tpu_custom_call.1} parent=1 // pred_check_branch
      %40 = sbr.rel (0) target = $region21
    $region20: #{tpu_custom_call.1} parent=1 // pred_region
      %42 = dma.done [#allocation6], 128
    $region21: #{tpu_custom_call.1} parent=1 // pred_fallthru
      _
    %v43 = vld [vmem:[#allocation2] sm:$0xff]
    %v44 = vld [vmem:[#allocation5] sm:$0x1f]
    %v45 = vld [vmem:[%s2] sm:$0x1]
    %v47 = vperm.slane %v45, 0
    %vm49 = vcmask 39936
    %v51 = vsel %vm49, %v43, 0
    %vm53 = vcmask 1044480
    %v55 = vsel %vm53, %v44, 0
    %57 = vmatpush.msra.mxu0 0.0
    %58 = vmatpush.msra.mxu0 0.0
    %59 = vmatpush.msra.mxu0 0.0
    %60 = vmatpush.msra.mxu0 0.0
    %61 = vmatpush.msra.mxu0 0.0
    %62 = vmatpush.msra.mxu0 0.0
    %63 = vmatpush.msra.mxu0 0.0
    %64 = vmatpush.msra.mxu0 0.0
    %65 = vmatpush.msra.mxu0 0.0
    %66 = vmatpush.msra.mxu0 0.0
    %67 = vmatpush.msra.mxu0 0.0
    %68 = vmatpush.msra.mxu0 0.0
    %69 = vmatpush.msra.mxu0 0.0
    %70 = vmatpush.msra.mxu0 0.0
    %71 = vmatpush.msra.mxu0 0.0
    %72 = vmatpush.msra.mxu0 %v55
    %73 = vmatmul.f32.gmra.mxu0 %v51
    %v74 = vpop.f32.mrf.mxu0
    %v75 = vadd.f32 %v47, %v74
    %76 = vdwg.mxu0
    %77 = vst.msk [vmem:[#allocation7] sm:$0xff] %vm49, %v75
    // Predicated region
    $region22: #{tpu_custom_call.1} parent=1 // pred_check
      _
    $region23: #{tpu_custom_call.1} parent=1 // pred_check_branch
      %79 = sbr.rel (0) target = $region25
    $region24: #{tpu_custom_call.1} parent=1 // pred_region
      %81 = vsyncadd [#allocation4], 0
      %s83 = sshll.u32 [#allocation7], 4
      %s84 = int_to_ptr.vmem [resolvable:$true] %s83
      %s85 = sshll.u32 %s3, 4
      %s86 = int_to_ptr.hbm [resolvable:$true] %s85
      %88 = dma.vmem_to_hbm [thread:$0]  %s84, 128, %s86, [#allocation4]
    $region25: #{tpu_custom_call.1} parent=1 // pred_fallthru
      _
    // Predicated region
    $region26: #{tpu_custom_call.1} parent=1 // pred_check
      _
    $region27: #{tpu_custom_call.1} parent=1 // pred_check_branch
      %90 = sbr.rel (0) target = $region29
    $region28: #{tpu_custom_call.1} parent=1 // pred_region
      %92 = dma.done [#allocation4], 128
    $region29: #{tpu_custom_call.1} parent=1 // pred_fallthru
      _
    %93 = vsyncpa [#allocation3], 1
    %94 = vsyncpa [#allocation6], 1
    %95 = vsyncpa [#allocation4], 1

</llo_original>
